<compile_context>
chip_gen: v5e
topology: v5e:2x2
jax: 0.10.0
libtpu: 0.0.40
codegen_flags: <defaults>
</compile_context>

<pallas_src>
import jax
import jax.numpy as jnp
import numpy as np
from jax import lax
from jax.experimental import pallas as pl
from jax.experimental.pallas import tpu as pltpu


# ---------------------------------------------------------------------------
# Kernel 1: ConvTranspose2d(kernel=2, stride=2)  ==  one channel matmul per
# batch element producing all four (a, b) sub-positions at once; the spatial
# 2x2 pixel-shuffle is pure layout and is done at the wrapper boundary.
# ---------------------------------------------------------------------------
def _upconv2x2_kernel(x_ref, w_ref, b_ref, o_ref):
    # x_ref: (1, H, W, Cin)   w_ref: (Cin, 4*Cu)   b_ref: (1, 4*Cu)
    # o_ref: (1, H*W, 4*Cu)   columns ordered (a, b, cu), k = (a*2 + b)*Cu + cu
    H, W, Cin = x_ref.shape[1], x_ref.shape[2], x_ref.shape[3]
    x2d = x_ref[0].reshape(H * W, Cin)
    y = jnp.dot(x2d, w_ref[...], preferred_element_type=jnp.float32) + b_ref[...]
    o_ref[0] = y.astype(o_ref.dtype)


def upconv2x2_nhwc(x, w_pt, b):
    """x: (N, H, W, Cin) NHWC; w_pt: (Cin, Cu, 2, 2) (PyTorch ConvTranspose2d);
    returns (N, 2H, 2W, Cu)."""
    N, H, W, Cin = x.shape
    Cu = w_pt.shape[1]
    assert w_pt.shape == (Cin, Cu, 2, 2)
    # (Cin, Cu, 2, 2) -> (Cin, a, b, Cu) -> (Cin, 4*Cu)
    w2d = jnp.transpose(w_pt, (0, 2, 3, 1)).reshape(Cin, 4 * Cu).astype(jnp.float32)
    b2d = jnp.tile(b.astype(jnp.float32), 4).reshape(1, 4 * Cu)

    y = pl.pallas_call(
        _upconv2x2_kernel,
        out_shape=jax.ShapeDtypeStruct((N, H * W, 4 * Cu), jnp.float32),
        grid_spec=pltpu.PrefetchScalarGridSpec(
            num_scalar_prefetch=0,
            grid=(N,),
            in_specs=[
                pl.BlockSpec((1, H, W, Cin), lambda n: (n, 0, 0, 0)),
                pl.BlockSpec((Cin, 4 * Cu), lambda n: (0, 0)),
                pl.BlockSpec((1, 4 * Cu), lambda n: (0, 0)),
            ],
            out_specs=pl.BlockSpec((1, H * W, 4 * Cu), lambda n: (n, 0, 0)),
        ),
        compiler_params=pltpu.CompilerParams(dimension_semantics=("parallel",)),
    )(x.astype(jnp.float32), w2d, b2d)

    # pixel-shuffle (pure layout): (N, H*W, (a,b,Cu)) -> (N, 2H, 2W, Cu)
    y = y.reshape(N, H, W, 2, 2, Cu)
    y = jnp.transpose(y, (0, 1, 3, 2, 4, 5)).reshape(N, 2 * H, 2 * W, Cu)
    return y


# ---------------------------------------------------------------------------
# Kernel 2: fused Block over the (virtual) concat [x_up, enc]:
#   ReLU(conv2(ReLU(conv1(cat(x_up, enc)))))   3x3 convs, padding=1.
# The concat never exists: conv1 weights are split into an x_up half and an
# enc half and both contribute to the same f32 accumulator per tap.
# ---------------------------------------------------------------------------
def _block_dual_kernel(xu_ref, en_ref, w1u_ref, w1e_ref, b1_ref, w2_ref, b2_ref,
                       o_ref, xu_pad, en_pad, h_pad):
    # xu_ref: (1, Hb, Wb, Cu)   en_ref: (1, Hb, Wb, Ce)
    # w1u_ref: (9, Cu, Cm)  w1e_ref: (9, Ce, Cm)  b1_ref: (1, Cm)
    # w2_ref : (9, Cm, Co)  b2_ref: (1, Co)       o_ref: (1, Hb, Wb, Co)
    # *_pad  : (Hb+2, Wb+2, C) zero-padded VMEM scratches
    Hb, Wb = o_ref.shape[1], o_ref.shape[2]
    Cu = xu_ref.shape[3]
    Ce = en_ref.shape[3]
    Cm = b1_ref.shape[1]
    Co = o_ref.shape[3]

    # Zero only the 1-pixel halo (interior is fully overwritten below). Done
    # every grid step so it stays correct when the batch axis is split across
    # TensorCores ("parallel") -- scratch is uninitialized per core.
    def zero_halo(ref):
        hp, wp, c = ref.shape
        ref[0:1, :, :] = jnp.zeros((1, wp, c), jnp.float32)
        ref[hp - 1:hp, :, :] = jnp.zeros((1, wp, c), jnp.float32)
        ref[:, 0:1, :] = jnp.zeros((hp, 1, c), jnp.float32)
        ref[:, wp - 1:wp, :] = jnp.zeros((hp, 1, c), jnp.float32)

    zero_halo(xu_pad)
    zero_halo(en_pad)
    zero_halo(h_pad)

    xu_pad[1:Hb + 1, 1:Wb + 1, :] = xu_ref[0]
    en_pad[1:Hb + 1, 1:Wb + 1, :] = en_ref[0]

    # ---- conv1 (3x3, pad 1) over cat([x_up, enc], channel) + ReLU ----
    # One MXU dot per (tap, source); channel reduction runs on the MXU.
    acc1 = jnp.zeros((Hb * Wb, Cm), jnp.float32)
    for dy in range(3):
        for dx in range(3):
            t = dy * 3 + dx
            xs = xu_pad[dy:dy + Hb, dx:dx + Wb, :].reshape(Hb * Wb, Cu)
            es = en_pad[dy:dy + Hb, dx:dx + Wb, :].reshape(Hb * Wb, Ce)
            acc1 = acc1 + jnp.dot(xs, w1u_ref[t], preferred_element_type=jnp.float32)
            acc1 = acc1 + jnp.dot(es, w1e_ref[t], preferred_element_type=jnp.float32)
    h1 = jnp.maximum(acc1 + b1_ref[...], 0.0)                 # bias added once
    h_pad[1:Hb + 1, 1:Wb + 1, :] = h1.reshape(Hb, Wb, Cm)

    # ---- conv2 (3x3, pad 1) + ReLU ----
    acc2 = jnp.zeros((Hb * Wb, Co), jnp.float32)
    for dy in range(3):
        for dx in range(3):
            t = dy * 3 + dx
            hs = h_pad[dy:dy + Hb, dx:dx + Wb, :].reshape(Hb * Wb, Cm)
            acc2 = acc2 + jnp.dot(hs, w2_ref[t], preferred_element_type=jnp.float32)
    out = jnp.maximum(acc2 + b2_ref[...], 0.0)
    o_ref[0] = out.reshape(Hb, Wb, Co).astype(o_ref.dtype)


def block_dual_nhwc(xu, enc, w1_pt, b1, w2_pt, b2):
    """Block over cat([xu, enc], channel) without materializing the concat.
    xu: (N, Hb, Wb, Cu), enc: (N, Hb, Wb, Ce) NHWC; PyTorch OIHW conv weights
    (conv1 input channels are ordered [xu, enc], matching torch.cat dim=1)."""
    N, Hb, Wb, Cu = xu.shape
    Ce = enc.shape[3]
    Cm = w1_pt.shape[0]
    Co = w2_pt.shape[0]
    assert w1_pt.shape == (Cm, Cu + Ce, 3, 3)
    assert w2_pt.shape == (Co, Cm, 3, 3)

    # OIHW -> (tap, in, out) with tap = dy*3 + dx
    w1t = jnp.transpose(w1_pt, (2, 3, 1, 0)).reshape(9, Cu + Ce, Cm).astype(jnp.float32)
    w1u = w1t[:, :Cu, :]
    w1e = w1t[:, Cu:, :]
    w2t = jnp.transpose(w2_pt, (2, 3, 1, 0)).reshape(9, Cm, Co).astype(jnp.float32)
    b1r = b1.reshape(1, Cm).astype(jnp.float32)
    b2r = b2.reshape(1, Co).astype(jnp.float32)
    Hp, Wp = Hb + 2, Wb + 2

    return pl.pallas_call(
        _block_dual_kernel,
        out_shape=jax.ShapeDtypeStruct((N, Hb, Wb, Co), jnp.float32),
        grid_spec=pltpu.PrefetchScalarGridSpec(
            num_scalar_prefetch=0,
            grid=(N,),
            in_specs=[
                pl.BlockSpec((1, Hb, Wb, Cu), lambda n: (n, 0, 0, 0)),
                pl.BlockSpec((1, Hb, Wb, Ce), lambda n: (n, 0, 0, 0)),
                pl.BlockSpec((9, Cu, Cm), lambda n: (0, 0, 0)),
                pl.BlockSpec((9, Ce, Cm), lambda n: (0, 0, 0)),
                pl.BlockSpec((1, Cm), lambda n: (0, 0)),
                pl.BlockSpec((9, Cm, Co), lambda n: (0, 0, 0)),
                pl.BlockSpec((1, Co), lambda n: (0, 0)),
            ],
            out_specs=pl.BlockSpec((1, Hb, Wb, Co), lambda n: (n, 0, 0, 0)),
            scratch_shapes=[
                pltpu.VMEM((Hp, Wp, Cu), jnp.float32),   # padded x_up
                pltpu.VMEM((Hp, Wp, Ce), jnp.float32),   # padded enc
                pltpu.VMEM((Hp, Wp, Cm), jnp.float32),   # padded conv1 output
            ],
        ),
        compiler_params=pltpu.CompilerParams(dimension_semantics=("parallel",)),
    )(xu.astype(jnp.float32), enc.astype(jnp.float32), w1u, w1e, b1r, w2t, b2r)


# ---------------------------------------------------------------------------
# Decoder forward (wrapper glue: NCHW<->NHWC at the boundary, center-crop,
# pixel-shuffle; all convolution arithmetic is inside the Pallas kernels).
# ---------------------------------------------------------------------------
def _center_crop_nhwc(enc, Ht, Wt):
    He, We = enc.shape[1], enc.shape[2]
    top = int(round((He - Ht) / 2.0))
    left = int(round((We - Wt) / 2.0))
    # TODO(synk): torchvision CenterCrop also zero-pads when the image is
    # smaller than the target; the U-Net decoder never hits that branch here.
    return enc[:, top:top + Ht, left:left + Wt, :]


def decoder_forward(x_nchw, encoder_features_nchw, params):
    """x_nchw: (N, ch[0], H, W); encoder_features_nchw[i]: (N, ch[i+1], >=2^(i+1)H, ...)."""
    x = jnp.transpose(x_nchw, (0, 2, 3, 1)).astype(jnp.float32)   # NHWC internally
    for p, enc in zip(params, encoder_features_nchw):
        x = upconv2x2_nhwc(x, p["up_w"], p["up_b"])
        e = jnp.transpose(enc, (0, 2, 3, 1)).astype(jnp.float32)
        e = _center_crop_nhwc(e, x.shape[1], x.shape[2])
        x = block_dual_nhwc(x, e, p["w1"], p["b1"], p["w2"], p["b2"])
    return jnp.transpose(x, (0, 3, 1, 2))                         # back to NCHW


# ---------------------------------------------------------------------------
# Pure-JAX reference (matches PyTorch semantics) for the self-check.
# ---------------------------------------------------------------------------
def _reference(x, encoder_features, params):
    dn = ("NCHW", "OIHW", "NCHW")
    for p, enc in zip(params, encoder_features):
        N, Cin, H, W = x.shape
        Cu = p["up_w"].shape[1]
        # ConvTranspose2d(k=2, s=2): every input pixel scatters a 2x2 block.
        y = jnp.einsum("nchw,cdab->ndhawb", x, p["up_w"])
        y = y.reshape(N, Cu, 2 * H, 2 * W) + p["up_b"].reshape(1, -1, 1, 1)
        He, We = enc.shape[2], enc.shape[3]
        top = int(round((He - 2 * H) / 2.0))
        left = int(round((We - 2 * W) / 2.0))
        e = enc[:, :, top:top + 2 * H, left:left + 2 * W]
        z = jnp.concatenate([y, e], axis=1)
        z = lax.conv_general_dilated(z, p["w1"], (1, 1), ((1, 1), (1, 1)),
                                     dimension_numbers=dn)
        z = jnp.maximum(z + p["b1"].reshape(1, -1, 1, 1), 0.0)
        z = lax.conv_general_dilated(z, p["w2"], (1, 1), ((1, 1), (1, 1)),
                                     dimension_numbers=dn)
        x = jnp.maximum(z + p["b2"].reshape(1, -1, 1, 1), 0.0)
    return x


if __name__ == "__main__":
    ch_list = (16, 8, 4)
    N, H0, W0 = 2, 8, 8

    key = jax.random.PRNGKey(0)
    keys = jax.random.split(key, 16)

    x = jax.random.normal(keys[0], (N, ch_list[0], H0, W0), jnp.float32)
    # Encoder skip features slightly larger than the upsampled x so that the
    # CenterCrop path is actually exercised (U-Net style).
    enc_feats = (
        jax.random.normal(keys[1], (N, ch_list[1], 2 * H0 + 2, 2 * W0 + 2), jnp.float32),
        jax.random.normal(keys[2], (N, ch_list[2], 4 * H0 + 2, 4 * W0 + 2), jnp.float32),
    )

    # Parameters in PyTorch-native layouts (ConvTranspose2d: (in, out, kH, kW);
    # Conv2d: OIHW), uniform in +/- 1/sqrt(fan_in) like PyTorch defaults.
    params = []
    k = 3
    for i in range(len(ch_list) - 1):
        cin, cout = ch_list[i], ch_list[i + 1]
        bu = 1.0 / np.sqrt(cin * 2 * 2)
        bc1 = 1.0 / np.sqrt(cin * 3 * 3)
        bc2 = 1.0 / np.sqrt(cout * 3 * 3)
        params.append(dict(
            up_w=jax.random.uniform(keys[k + 0], (cin, cout, 2, 2), jnp.float32, -bu, bu),
            up_b=jax.random.uniform(keys[k + 1], (cout,), jnp.float32, -bu, bu),
            w1=jax.random.uniform(keys[k + 2], (cout, cin, 3, 3), jnp.float32, -bc1, bc1),
            b1=jax.random.uniform(keys[k + 3], (cout,), jnp.float32, -bc1, bc1),
            w2=jax.random.uniform(keys[k + 4], (cout, cout, 3, 3), jnp.float32, -bc2, bc2),
            b2=jax.random.uniform(keys[k + 5], (cout,), jnp.float32, -bc2, bc2),
        ))
        k += 6

    out = jax.block_until_ready(decoder_forward(x, enc_feats, params))
    ref = jax.block_until_ready(_reference(x, enc_feats, params))

    assert out.shape == (N, ch_list[-1], 4 * H0, 4 * W0)
    # Tolerance sized for possible bf16-pass f32 MXU matmuls vs the XLA conv
    # reference; real layout/indexing bugs produce O(0.1..1) errors.
    np.testing.assert_allclose(np.asarray(out), np.asarray(ref),
                               rtol=5e-3, atol=5e-3)
    print("KERNEL_OK")
</pallas_src>

<mosaic_0001>
module attributes {stable_mosaic.version = 11 : i64} {
  func.func @_upconv2x2_kernel(%arg0: i32, %arg1: memref<1x8x8x16xf32, #tpu.memory_space<vmem>>, %arg2: memref<16x32xf32, #tpu.memory_space<vmem>>, %arg3: memref<1x32xf32, #tpu.memory_space<vmem>>, %arg4: memref<1x64x32xf32, #tpu.memory_space<vmem>>) attributes {dimension_semantics = [#tpu.dimension_semantics<parallel>], iteration_bounds = array<i64: 2>, scalar_prefetch = 0 : i64, scratch_operands = 0 : i64, tpu.core_type = #tpu.core_type<tc>, window_params = [{transform_indices = @transform_0, window_bounds = array<i64: 1, 8, 8, 16>}, {pipeline_mode = #tpu.pipeline_mode<synchronous>, transform_indices = @transform_1, window_bounds = array<i64: 16, 32>}, {pipeline_mode = #tpu.pipeline_mode<synchronous>, transform_indices = @transform_2, window_bounds = array<i64: 1, 32>}, {transform_indices = @transform_3, window_bounds = array<i64: 1, 64, 32>}]} {
    %c0 = arith.constant 0 : index
    %c0_0 = arith.constant 0 : index
    %c0_1 = arith.constant 0 : index
    %c0_2 = arith.constant 0 : index
    %0 = vector.load %arg1[%c0, %c0_0, %c0_1, %c0_2] : memref<1x8x8x16xf32, #tpu.memory_space<vmem>>, vector<1x8x8x16xf32>
    %1 = vector.shape_cast %0 : vector<1x8x8x16xf32> to vector<8x8x16xf32>
    %2 = vector.shape_cast %1 : vector<8x8x16xf32> to vector<64x16xf32>
    %c0_3 = arith.constant 0 : index
    %c0_4 = arith.constant 0 : index
    %3 = vector.load %arg2[%c0_3, %c0_4] : memref<16x32xf32, #tpu.memory_space<vmem>>, vector<16x32xf32>
    %cst = arith.constant dense<0.000000e+00> : vector<64x32xf32>
    %4 = tpu.matmul %2, %3, %cst {dimension_numbers = #tpu.dot_dimension_numbers<[1], [0], [0], [1], [0, 0, 1, 1], [], []>} : vector<64x16xf32>, vector<16x32xf32>, vector<64x32xf32> -> vector<64x32xf32>
    %c0_5 = arith.constant 0 : index
    %c0_6 = arith.constant 0 : index
    %5 = vector.load %arg3[%c0_5, %c0_6] : memref<1x32xf32, #tpu.memory_space<vmem>>, vector<1x32xf32>
    %6 = vector.broadcast %5 : vector<1x32xf32> to vector<64x32xf32>
    %7 = arith.addf %4, %6 : vector<64x32xf32>
    %c0_7 = arith.constant 0 : index
    %c0_8 = arith.constant 0 : index
    %c0_9 = arith.constant 0 : index
    %8 = vector.load %arg4[%c0_7, %c0_8, %c0_9] : memref<1x64x32xf32, #tpu.memory_space<vmem>>, vector<1x64x32xf32>
    %9 = vector.shape_cast %8 : vector<1x64x32xf32> to vector<64x32xf32>
    %10 = vector.shape_cast %7 : vector<64x32xf32> to vector<1x64x32xf32>
    tpu.vector_store %arg4[%c0_7, %c0_8, %c0_9], %10 {strides = array<i32>} : memref<1x64x32xf32, #tpu.memory_space<vmem>>, vector<1x64x32xf32>,
    return
  }
  func.func @transform_0(%arg0: i32) -> (i32, i32, i32, i32) {
    %c0_i32 = arith.constant 0 : i32
    %c0_i32_0 = arith.constant 0 : i32
    %c0_i32_1 = arith.constant 0 : i32
    %c0_i32_2 = arith.constant 0 : i32
    return %arg0, %c0_i32, %c0_i32_0, %c0_i32_1 : i32, i32, i32, i32
  }
  func.func @transform_1(%arg0: i32) -> (i32, i32) {
    %c0_i32 = arith.constant 0 : i32
    %c0_i32_0 = arith.constant 0 : i32
    %c0_i32_1 = arith.constant 0 : i32
    return %c0_i32, %c0_i32_0 : i32, i32
  }
  func.func @transform_2(%arg0: i32) -> (i32, i32) {
    %c0_i32 = arith.constant 0 : i32
    %c0_i32_0 = arith.constant 0 : i32
    %c0_i32_1 = arith.constant 0 : i32
    return %c0_i32, %c0_i32_0 : i32, i32
  }
  func.func @transform_3(%arg0: i32) -> (i32, i32, i32) {
    %c0_i32 = arith.constant 0 : i32
    %c0_i32_0 = arith.constant 0 : i32
    %c0_i32_1 = arith.constant 0 : i32
    return %arg0, %c0_i32, %c0_i32_0 : i32, i32, i32
  }
}

</mosaic_0001>

<llo_original>
// kernel: tpu_custom_call.1
$region0: #{tpu_custom_call.1}
  #allocation0 [shape = 'u32[]', space=smem, size = 0x4, offset = 0x4, fixed_abs, tag = 'smem constant byte address 0x4 - core index']
  #allocation1 [shape = 'u32[72,128]{1,0:T(1,128)}', space=vmem, size = 0x9000, scoped, tag = 'internal scratch']
  %s0 = inlined_call_operand.hbm [shape: f32[2,8,8,16], index: 0, kind: input, shape index: {}]
  %s1 = inlined_call_operand.hbm [shape: f32[16,32], index: 1, kind: input, shape index: {}]
  %s2 = inlined_call_operand.vmem [shape: f32[1,32], index: 2, kind: input, shape index: {}]
  %s3 = inlined_call_operand.vmem [shape: f32[2,64,32], index: 3, kind: output, shape index: {}]
  %s4 = sld [smem:[#allocation0]]
  $region53: #{tpu_custom_call.1} parent=0
    _
  %s6 = ssub.s32 1, %s4
  %s7 = scalar_select 0, %s6, %s4
  $region1: #{tpu_custom_call.1} parent=0
    #allocation2 [shape = 'u8[65536]{0}', space=vmem, size = 0x10000, scoped, tag = 'input window, operand 0']
    #allocation3 [shape = 's32[2]{0}', space=sflag, size = 0x8, scoped, tag = 'scoped memory for tpu_custom_call.1']
    #allocation4 [shape = 'u8[8192]{0}', space=vmem, size = 0x2000, scoped, tag = 'input window, operand 1, single buffered']
    #allocation5 [shape = 's32[1]{0}', space=sflag, size = 0x4, scoped, tag = 'scoped memory for tpu_custom_call.1']
    %8 = vsyncpa [#allocation3], 0
    %s9 = scalar_lea.sflag [#allocation3], 1
    %10 = vsyncpa %s9, 0
    %11 = vsyncpa [#allocation5], 0
    loop: start=0, step=1, limit=4
    $region2: #{tpu_custom_call.1} parent=1 // loop_pre_header
      _
    $region3: #{tpu_custom_call.1} parent=1 // loop_header
      %s13 = sphi 0, %s17
      %p14 = scmp.ge.s32.totalorder %s13, 4
      %s23 = sphi 0, %s25
      %s26 = sphi 0, %s23
      %s27 = sphi 0, %s26
      %s43 = sphi 0, %s27
      %s47 = sphi 0, %s47
      %s49 = sphi 0, %s47
      %s50 = sphi 0, %s49
      %s64 = sphi 0, %s50
      %s68 = sphi 0, %s68
      %s70 = sphi 0, %s68
      %s71 = sphi 0, %s70
      %s85 = sphi 0, %s71
      %s91 = sphi 0, %s93
      %s94 = sphi 0, %s91
      %s95 = sphi 0, %s94
      %s111 = sphi 0, %s95
    $region4: #{tpu_custom_call.1} parent=1 // loop_header_branch
      %16 = sbr.rel (%p14) target = $region8
    $region5: #{tpu_custom_call.1} parent=1 // loop_body
      %s18 = ssub.s32 %s13, 1
      %s19 = ssub.s32 %s13, 2
      %s20 = sadd.s32 %s13, 1
      %s21 = ssub.s32 %s13, %s20
      %p22 = scmp.eq.s32.totalorder %s21, 0
      %s24 = sadd.s32 %s23, 1
      %s25 = scalar_select %p22, %s23, %s24
      %p28 = pneg %p22
      %p29 = scmp.eq.s32.totalorder %s13, 1
      %p30 = por %p28, %p29
      %p31 = scmp.ne.s32.totalorder %s23, %s26
      %p32 = scmp.eq.s32.totalorder %s13, 0
      %p33 = por %p31, %p32
      %p34 = scmp.ne.s32.totalorder %s23, %s26
      %p35 = scmp.eq.s32.totalorder %s18, 1
      %p36 = por %p34, %p35
      %p37 = scmp.ne.s32.totalorder %s26, %s27
      %p38 = scmp.eq.s32.totalorder %s18, 0
      %p39 = por %p37, %p38
      %p40 = scmp.ne.s32.totalorder %s26, %s27
      %p41 = scmp.eq.s32.totalorder %s19, 1
      %p42 = por %p40, %p41
      %p44 = scmp.ne.s32.totalorder %s27, %s43
      %p45 = scmp.eq.s32.totalorder %s19, 0
      %p46 = por %p44, %p45
      %s48 = sadd.s32 %s47, 1
      %p51 = scmp.eq.s32.totalorder %s13, 1
      %p52 = scmp.ne.s32.totalorder %s47, %s49
      %p53 = scmp.eq.s32.totalorder %s13, 0
      %p54 = por %p52, %p53
      %p55 = scmp.ne.s32.totalorder %s47, %s49
      %p56 = scmp.eq.s32.totalorder %s18, 1
      %p57 = por %p55, %p56
      %p58 = scmp.ne.s32.totalorder %s49, %s50
      %p59 = scmp.eq.s32.totalorder %s18, 0
      %p60 = por %p58, %p59
      %p61 = scmp.ne.s32.totalorder %s49, %s50
      %p62 = scmp.eq.s32.totalorder %s19, 1
      %p63 = por %p61, %p62
      %p65 = scmp.ne.s32.totalorder %s50, %s64
      %p66 = scmp.eq.s32.totalorder %s19, 0
      %p67 = por %p65, %p66
      %s69 = sadd.s32 %s68, 1
      %p72 = scmp.eq.s32.totalorder %s13, 1
      %p73 = scmp.ne.s32.totalorder %s68, %s70
      %p74 = scmp.eq.s32.totalorder %s13, 0
      %p75 = por %p73, %p74
      %p76 = scmp.ne.s32.totalorder %s68, %s70
      %p77 = scmp.eq.s32.totalorder %s18, 1
      %p78 = por %p76, %p77
      %p79 = scmp.ne.s32.totalorder %s70, %s71
      %p80 = scmp.eq.s32.totalorder %s18, 0
      %p81 = por %p79, %p80
      %p82 = scmp.ne.s32.totalorder %s70, %s71
      %p83 = scmp.eq.s32.totalorder %s19, 1
      %p84 = por %p82, %p83
      %p86 = scmp.ne.s32.totalorder %s71, %s85
      %p87 = scmp.eq.s32.totalorder %s19, 0
      %p88 = por %p86, %p87
      %s89 = ssub.s32 %s13, %s20
      %p90 = scmp.eq.s32.totalorder %s89, 0
      %s92 = sadd.s32 %s91, 1
      %s93 = scalar_select %p90, %s91, %s92
      %p96 = pneg %p90
      %p97 = scmp.eq.s32.totalorder %s13, 1
      %p98 = por %p96, %p97
      %p99 = scmp.ne.s32.totalorder %s91, %s94
      %p100 = scmp.eq.s32.totalorder %s13, 0
      %p101 = por %p99, %p100
      %p102 = scmp.ne.s32.totalorder %s91, %s94
      %p103 = scmp.eq.s32.totalorder %s18, 1
      %p104 = por %p102, %p103
      %p105 = scmp.ne.s32.totalorder %s94, %s95
      %p106 = scmp.eq.s32.totalorder %s18, 0
      %p107 = por %p105, %p106
      %p108 = scmp.ne.s32.totalorder %s94, %s95
      %p109 = scmp.eq.s32.totalorder %s19, 1
      %p110 = por %p108, %p109
      %p112 = scmp.ne.s32.totalorder %s95, %s111
      %p113 = scmp.eq.s32.totalorder %s19, 0
      %p114 = por %p112, %p113
      %p115 = scmp.le.s32.totalorder 1, %s13
      %p116 = scmp.lt.s32.totalorder %s13, 3
      %p117 = pnand %p115, %p116
      %p118 = pneg %p117
      // Predicated region
      $region9: #{tpu_custom_call.1} parent=5 // pred_check
        _
      $region10: #{tpu_custom_call.1} parent=5 // pred_check_branch
        %120 = sbr.rel (%p117) target = $region12
      $region11: #{tpu_custom_call.1} parent=5 // pred_region
        %s121 = ssub.s32 %s13, 1
        // Predicated region
        $region13: #{tpu_custom_call.1} parent=11 // pred_check
          %p122 = pneg %p60
        $region14: #{tpu_custom_call.1} parent=11 // pred_check_branch
          %124 = sbr.rel (%p122) target = $region16
        $region15: #{tpu_custom_call.1} parent=11 // pred_region
          %126 = vsyncadd [#allocation5], 0
          %s127 = sshll.u32 %s1, 4
          %s128 = int_to_ptr.hbm [resolvable:$true] %s127
          %s129 = sshll.u32 [#allocation4], 4
          %s130 = int_to_ptr.vmem [resolvable:$true] %s129
          %135 = dma.hbm_to_vmem [thread:$0]  %s128, 256, %s130, [#allocation5], 128, 128, 8
        $region16: #{tpu_custom_call.1} parent=11 // pred_fallthru
          _
        // Predicated region
        $region17: #{tpu_custom_call.1} parent=11 // pred_check
          %p136 = pneg %p81
        $region18: #{tpu_custom_call.1} parent=11 // pred_check_branch
          %138 = sbr.rel (%p136) target = $region20
        $region19: #{tpu_custom_call.1} parent=11 // pred_region
          _
        $region20: #{tpu_custom_call.1} parent=11 // pred_fallthru
          _
      $region12: #{tpu_custom_call.1} parent=5 // pred_fallthru
        _
      %p139 = scmp.lt.s32.totalorder %s13, 2
      // Predicated region
      $region21: #{tpu_custom_call.1} parent=5 // pred_check
        %p140 = pneg %p139
      $region22: #{tpu_custom_call.1} parent=5 // pred_check_branch
        %142 = sbr.rel (%p140) target = $region24
      $region23: #{tpu_custom_call.1} parent=5 // pred_region
        // Predicated region
        $region25: #{tpu_custom_call.1} parent=23 // pred_check
          %p143 = pneg %p33
        $region26: #{tpu_custom_call.1} parent=23 // pred_check_branch
          %145 = sbr.rel (%p143) target = $region28
        $region27: #{tpu_custom_call.1} parent=23 // pred_region
          %s146 = sand.u32 %s23, 1
          %s147 = scalar_lea.sflag [#allocation3], %s146
          %s148 = sand.u32 %s23, 1
          %s149 = smul.addr %s148, 64
          %s150 = scalar_lea.vmem [#allocation2], %s149
          %152 = vsyncadd %s147, 0
          %s153 = smul.addr %s13, 8
          %s154 = smul.addr %s153, 8
          %s155 = scalar_lea.hbm %s0, %s154
          %s156 = sshll.u32 %s155, 4
          %s157 = int_to_ptr.hbm [resolvable:$true] %s156
          %s158 = sshll.u32 %s150, 4
          %s159 = int_to_ptr.vmem [resolvable:$true] %s158
          %164 = dma.hbm_to_vmem [thread:$0]  %s157, 1024, %s159, %s147, 128, 128, 8
        $region28: #{tpu_custom_call.1} parent=23 // pred_fallthru
          _
      $region24: #{tpu_custom_call.1} parent=5 // pred_fallthru
        _
      %p165 = scmp.le.s32.totalorder 1, %s13
      %p166 = scmp.lt.s32.totalorder %s13, 3
      %p167 = pnand %p165, %p166
      %p168 = pneg %p167
      // Predicated region
      $region29: #{tpu_custom_call.1} parent=5 // pred_check
        _
      $region30: #{tpu_custom_call.1} parent=5 // pred_check_branch
        %170 = sbr.rel (%p167) target = $region32
      $region31: #{tpu_custom_call.1} parent=5 // pred_region
        %s171 = ssub.s32 %s13, 1
        %s172 = sand.u32 %s26, 1
        %s173 = scalar_lea.sflag [#allocation3], %s172
        %s174 = sand.u32 %s26, 1
        %s175 = smul.addr %s174, 64
        %s176 = scalar_lea.vmem [#allocation2], %s175
        // Predicated region
        $region33: #{tpu_custom_call.1} parent=31 // pred_check
          %p177 = pneg %p39
        $region34: #{tpu_custom_call.1} parent=31 // pred_check_branch
          %179 = sbr.rel (%p177) target = $region36
        $region35: #{tpu_custom_call.1} parent=31 // pred_region
          %181 = dma.done %s173, 1024
        $region36: #{tpu_custom_call.1} parent=31 // pred_fallthru
          _
        // Predicated region
        $region37: #{tpu_custom_call.1} parent=31 // pred_check
          %p182 = pneg %p60
        $region38: #{tpu_custom_call.1} parent=31 // pred_check_branch
          %184 = sbr.rel (%p182) target = $region40
        $region39: #{tpu_custom_call.1} parent=31 // pred_region
          %186 = dma.done [#allocation5], 256
        $region40: #{tpu_custom_call.1} parent=31 // pred_fallthru
          _
        %s187 = sand.u32 %s26, 1
        %s188 = scalar_lea.sflag [#allocation3], %s187
        %s189 = sand.u32 %s26, 1
        %s190 = smul.addr %s189, 64
        %s191 = scalar_lea.vmem [#allocation2], %s190
        %p192 = pneg %p39
        %p193 = pneg %p36
        %p194 = pneg %p60
        %p195 = pneg %p57
        %p196 = pneg %p81
        %p197 = pneg %p78
        %p198 = pneg %p107
        %p199 = pneg %p104
        %p200 = scmp.lt.s32.totalorder %s18, 1
        %s201 = scalar_select %p200, %s18, 1
        %s202 = smul.addr %s201, 8
        %s203 = smul.addr %s202, 8
        %s204 = scalar_lea.vmem %s3, %s203
        %p205 = scmp.lt.s32.totalorder %s18, 1
        %s206 = scalar_select %p205, %s18, 1
        %s207 = smul.addr %s206, 8
        %s208 = smul.addr %s207, 8
        %s209 = scalar_lea.vmem %s3, %s208
        %v210 = vld [vmem:[%s176] sm:$0xff]
        %v211 = vld [vmem:[%s176 + $0x8] sm:$0xff]
        %v212 = vld [vmem:[%s176 + $0x10] sm:$0xff]
        %v213 = vld [vmem:[%s176 + $0x18] sm:$0xff]
        %v214 = vld [vmem:[%s176 + $0x20] sm:$0xff]
        %v215 = vld [vmem:[%s176 + $0x28] sm:$0xff]
        %v216 = vld [vmem:[%s176 + $0x30] sm:$0xff]
        %v217 = vld [vmem:[%s176 + $0x38] sm:$0xff]
        %v218 = vld [vmem:[#allocation4] sm:$0xff]
        %v219 = vld [vmem:[#allocation4 + $0x8] sm:$0xff]
        %v220 = vld [vmem:[%s2] sm:$0x1]
        %v222 = vperm.slane %v220, 0
        %vm224 = vcmask 130048
        %v226 = vsel %vm224, %v210, 0
        %v229 = vsel %vm224, %v211, 0
        %v232 = vsel %vm224, %v212, 0
        %v235 = vsel %vm224, %v213, 0
        %v238 = vsel %vm224, %v214, 0
        %v241 = vsel %vm224, %v215, 0
        %v244 = vsel %vm224, %v216, 0
        %v247 = vsel %vm224, %v217, 0
        %249 = vmatpush.msra.mxu0 0.0
        %250 = vmatpush.msra.mxu0 0.0
        %251 = vmatpush.msra.mxu0 0.0
        %252 = vmatpush.msra.mxu0 0.0
        %253 = vmatpush.msra.mxu0 0.0
        %254 = vmatpush.msra.mxu0 0.0
        %255 = vmatpush.msra.mxu0 0.0
        %256 = vmatpush.msra.mxu0 0.0
        %257 = vmatpush.msra.mxu0 0.0
        %258 = vmatpush.msra.mxu0 0.0
        %259 = vmatpush.msra.mxu0 0.0
        %260 = vmatpush.msra.mxu0 0.0
        %261 = vmatpush.msra.mxu0 0.0
        %262 = vmatpush.msra.mxu0 0.0
        %263 = vmatpush.msra.mxu0 %v219
        %264 = vmatpush.msra.mxu0 %v218
        %265 = vmatmul.f32.gmra.mxu0 %v226
        %v266 = vpop.f32.mrf.mxu0
        %v267 = vadd.f32 %v222, %v266
        %268 = vmatmul.f32.gmra.mxu0 %v229
        %v269 = vpop.f32.mrf.mxu0
        %v270 = vadd.f32 %v222, %v269
        %271 = vmatmul.f32.gmra.mxu0 %v232
        %v272 = vpop.f32.mrf.mxu0
        %v273 = vadd.f32 %v222, %v272
        %274 = vmatmul.f32.gmra.mxu0 %v235
        %v275 = vpop.f32.mrf.mxu0
        %v276 = vadd.f32 %v222, %v275
        %277 = vmatmul.f32.gmra.mxu0 %v238
        %v278 = vpop.f32.mrf.mxu0
        %v279 = vadd.f32 %v222, %v278
        %280 = vmatmul.f32.gmra.mxu0 %v241
        %v281 = vpop.f32.mrf.mxu0
        %v282 = vadd.f32 %v222, %v281
        %283 = vmatmul.f32.gmra.mxu0 %v244
        %v284 = vpop.f32.mrf.mxu0
        %v285 = vadd.f32 %v222, %v284
        %286 = vmatmul.f32.gmra.mxu0 %v247
        %v287 = vpop.f32.mrf.mxu0
        %v288 = vadd.f32 %v222, %v287
        %289 = vdwg.mxu0
        %vm290 = vcmask 261120
        %291 = vst.msk [vmem:[%s209] sm:$0xff] %vm290, %v267
        %292 = vst.msk [vmem:[%s209 + $0x8] sm:$0xff] %vm290, %v270
        %293 = vst.msk [vmem:[%s209 + $0x10] sm:$0xff] %vm290, %v273
        %294 = vst.msk [vmem:[%s209 + $0x18] sm:$0xff] %vm290, %v276
        %295 = vst.msk [vmem:[%s209 + $0x20] sm:$0xff] %vm290, %v279
        %296 = vst.msk [vmem:[%s209 + $0x28] sm:$0xff] %vm290, %v282
        %297 = vst.msk [vmem:[%s209 + $0x30] sm:$0xff] %vm290, %v285
        %298 = vst.msk [vmem:[%s209 + $0x38] sm:$0xff] %vm290, %v288
        %p299 = scmp.lt.s32.totalorder %s18, 1
        %s300 = scalar_select %p299, %s18, 1
        %s301 = smul.addr %s300, 8
        %s302 = smul.addr %s301, 8
        %s303 = scalar_lea.vmem %s3, %s302
        // Predicated region
        $region41: #{tpu_custom_call.1} parent=31 // pred_check
          %p304 = pneg %p104
        $region42: #{tpu_custom_call.1} parent=31 // pred_check_branch
          %306 = sbr.rel (%p304) target = $region44
        $region43: #{tpu_custom_call.1} parent=31 // pred_region
          _
        $region44: #{tpu_custom_call.1} parent=31 // pred_fallthru
          _
      $region32: #{tpu_custom_call.1} parent=5 // pred_fallthru
        _
      %p307 = scmp.le.s32.totalorder 2, %s13
      // Predicated region
      $region45: #{tpu_custom_call.1} parent=5 // pred_check
        %p308 = pneg %p307
      $region46: #{tpu_custom_call.1} parent=5 // pred_check_branch
        %310 = sbr.rel (%p308) target = $region48
      $region47: #{tpu_custom_call.1} parent=5 // pred_region
        %s311 = ssub.s32 %s13, 2
        // Predicated region
        $region49: #{tpu_custom_call.1} parent=47 // pred_check
          %p312 = pneg %p110
        $region50: #{tpu_custom_call.1} parent=47 // pred_check_branch
          %314 = sbr.rel (%p312) target = $region52
        $region51: #{tpu_custom_call.1} parent=47 // pred_region
          %p315 = scmp.lt.s32.totalorder %s19, 1
          %s316 = scalar_select %p315, %s19, 1
          %s317 = smul.addr %s316, 8
          %s318 = smul.addr %s317, 8
          %s319 = scalar_lea.vmem %s3, %s318
        $region52: #{tpu_custom_call.1} parent=47 // pred_fallthru
          _
      $region48: #{tpu_custom_call.1} parent=5 // pred_fallthru
        _
    $region6: #{tpu_custom_call.1} parent=1 // loop_footer
      %s17 = sadd.s32 1, %s13
    $region7: #{tpu_custom_call.1} parent=1 // loop_footer_branch
      %12 = sbr.rel target = $region3
    $region8: #{tpu_custom_call.1} parent=1 // loop_exit
      _
    %320 = vsyncpa [#allocation3], 1
    %s321 = scalar_lea.sflag [#allocation3], 1
    %322 = vsyncpa %s321, 1
    %323 = vsyncpa [#allocation5], 1

</llo_original>
